<compile_context>
chip_gen: v7x
topology: tpu7x:2x2x1
jax: 0.10.0
libtpu: 0.0.40
codegen_flags: <defaults>
</compile_context>

<pallas_src>
import jax
import jax.numpy as jnp
from jax.experimental import pallas as pl
from jax.experimental.pallas import tpu as pltpu

_LANE = 128
_LANE_CAP = 2048                      # max lane-tile width (multiple of 128)
_TARGET_BLOCK_BYTES = 4 * 1024 * 1024  # ~4 MiB per x/out tile
_MAX_ROWS = 2048


def _round_up(x, m):
    return ((x + m - 1) // m) * m


def _cdiv(a, b):
    return -(-a // b)


def _plan_tiles(B, D, in_dtype, out_dtype):
    """Pick (tm, tn, B_pad, D_pad): lane-dense, sublane-packed, ~4 MiB blocks,
    and >= 2 row blocks when possible so both v7x TensorCores get work."""
    in_size = jnp.dtype(in_dtype).itemsize
    out_size = jnp.dtype(out_dtype).itemsize
    pack = {4: 8, 2: 16, 1: 32}.get(in_size, 8)

    # Lane (last-dim) tiling: pad to a multiple of 128; split evenly if huge.
    D_pad = _round_up(D, _LANE)
    n_col = max(1, _cdiv(D_pad, _LANE_CAP))
    tn = _round_up(_cdiv(D_pad, n_col), _LANE)
    D_pad = _round_up(D_pad, tn)

    # Row tiling: ~_TARGET_BLOCK_BYTES per block of the widest dtype involved.
    bytes_per_row = tn * max(in_size, out_size)
    rows_budget = max(pack, (_TARGET_BLOCK_BYTES // bytes_per_row) // pack * pack)
    rows_budget = min(rows_budget, _MAX_ROWS)

    B_pad = _round_up(B, pack)
    n_row = max(1, _cdiv(B_pad, rows_budget))
    if n_row == 1 and B_pad >= 2 * pack:
        n_row = 2  # keep both v7x TensorCores busy (no-op on v5e/v6e)
    tm = _round_up(_cdiv(B_pad, n_row), pack)
    B_pad = _round_up(B_pad, tm)
    return tm, tn, B_pad, D_pad


def _rescale_kernel(x_ref, s_ref, b_ref, o_ref):
    # Pure VPU multiply-add stream; the 10**w / 10**b transcendentals were hoisted
    # to the wrapper.  Compute in f32 so low-precision inputs still match PyTorch's
    # type promotion against the f32 parameters.
    x = x_ref[...].astype(jnp.float32)
    o_ref[...] = (x * s_ref[...] + b_ref[...]).astype(o_ref.dtype)


def rescale_layer(x, weight, bias):
    """y = x * 10**weight + 10**bias; weight/bias have shape (D,) = x.shape[-1]."""
    D = x.shape[-1]
    assert weight.shape == (D,) and bias.shape == (D,)
    lead = x.shape[:-1]
    x2d = x.reshape(-1, D)
    B = x2d.shape[0]

    # Hoist the transcendentals (grid invariant, only D elements), kept in f32.
    scale = jnp.power(jnp.float32(10.0), weight.astype(jnp.float32)).reshape(1, D)
    shift = jnp.power(jnp.float32(10.0), bias.astype(jnp.float32)).reshape(1, D)

    out_dtype = jnp.promote_types(x.dtype, jnp.float32)
    tm, tn, B_pad, D_pad = _plan_tiles(B, D, x.dtype, out_dtype)

    pad_b, pad_d = B_pad - B, D_pad - D
    if pad_b or pad_d:
        x2d = jnp.pad(x2d, ((0, pad_b), (0, pad_d)))
    if pad_d:
        scale = jnp.pad(scale, ((0, 0), (0, pad_d)))
        shift = jnp.pad(shift, ((0, 0), (0, pad_d)))

    # Row-block axis innermost so the (1, tn) scale/shift tiles stay resident
    # (not re-DMA'd) across the inner sweep.
    grid = (D_pad // tn, B_pad // tm)

    out = pl.pallas_call(
        _rescale_kernel,
        out_shape=jax.ShapeDtypeStruct((B_pad, D_pad), out_dtype),
        grid_spec=pltpu.PrefetchScalarGridSpec(
            num_scalar_prefetch=0,
            grid=grid,
            in_specs=[
                pl.BlockSpec((tm, tn), lambda j, i: (i, j)),  # x tile
                pl.BlockSpec((1, tn), lambda j, i: (0, j)),   # scale (row broadcast)
                pl.BlockSpec((1, tn), lambda j, i: (0, j)),   # shift (row broadcast)
            ],
            out_specs=pl.BlockSpec((tm, tn), lambda j, i: (i, j)),
        ),
        compiler_params=pltpu.CompilerParams(
            dimension_semantics=("parallel", "parallel"),
            vmem_limit_bytes=48 * 1024 * 1024,
        ),
    )(x2d, scale, shift)

    out = out[:B, :D]
    return out.reshape(*lead, D)


def _reference_and_tol(x, weight, bias):
    xf = x.astype(jnp.float32)
    s = jnp.power(jnp.float32(10.0), weight.astype(jnp.float32))
    t = jnp.power(jnp.float32(10.0), bias.astype(jnp.float32))
    ref = xf * s + t
    # Tolerance scaled by the magnitudes of the two summed terms: 10**w spans
    # ~1e-4..1e4 with the module's uniform(-4,4) init, so near-cancellation plus
    # rounding-order/FMA differences must not trip the check.
    tol = 1e-5 + 1e-5 * (jnp.abs(xf * s) + jnp.abs(t))
    return ref, tol


if __name__ == "__main__":
    key = jax.random.PRNGKey(0)
    keys = jax.random.split(key, 9)
    bound = 4.0  # matches torch.nn.init.uniform_(-4, 4)

    # 1) clean, lane-aligned small shape
    B1, D1 = 16, 128
    x1 = jax.random.normal(keys[0], (B1, D1), dtype=jnp.float32)
    w1 = jax.random.uniform(keys[1], (D1,), minval=-bound, maxval=bound, dtype=jnp.float32)
    b1 = jax.random.uniform(keys[2], (D1,), minval=-bound, maxval=bound, dtype=jnp.float32)
    out1 = jax.block_until_ready(rescale_layer(x1, w1, b1))
    ref1, tol1 = _reference_and_tol(x1, w1, b1)
    assert out1.shape == (B1, D1)
    assert bool(jnp.all(jnp.abs(out1 - ref1) <= tol1)), "mismatch vs reference (aligned)"

    # 2) awkward shape -> exercises sublane/lane padding + multiple row blocks
    B2, D2 = 10, 48
    x2 = jax.random.normal(keys[3], (B2, D2), dtype=jnp.float32)
    w2 = jax.random.uniform(keys[4], (D2,), minval=-bound, maxval=bound, dtype=jnp.float32)
    b2 = jax.random.uniform(keys[5], (D2,), minval=-bound, maxval=bound, dtype=jnp.float32)
    out2 = jax.block_until_ready(rescale_layer(x2, w2, b2))
    ref2, tol2 = _reference_and_tol(x2, w2, b2)
    assert out2.shape == (B2, D2)
    assert bool(jnp.all(jnp.abs(out2 - ref2) <= tol2)), "mismatch vs reference (padded)"

    # 3) bf16 input -> f32 output (matches PyTorch promotion with f32 parameters)
    B3, D3 = 12, 96
    x3 = jax.random.normal(keys[6], (B3, D3), dtype=jnp.bfloat16)
    w3 = jax.random.uniform(keys[7], (D3,), minval=-bound, maxval=bound, dtype=jnp.float32)
    b3 = jax.random.uniform(keys[8], (D3,), minval=-bound, maxval=bound, dtype=jnp.float32)
    out3 = jax.block_until_ready(rescale_layer(x3, w3, b3))
    assert out3.dtype == jnp.float32
    ref3, tol3 = _reference_and_tol(x3, w3, b3)
    assert out3.shape == (B3, D3)
    assert bool(jnp.all(jnp.abs(out3 - ref3) <= tol3)), "mismatch vs reference (bf16)"

    print("KERNEL_OK")
</pallas_src>

<mosaic_0001>
module attributes {stable_mosaic.version = 11 : i64} {
  func.func @_rescale_kernel(%arg0: i32, %arg1: i32, %arg2: memref<8x128xf32, #tpu.memory_space<vmem>>, %arg3: memref<1x128xf32, #tpu.memory_space<vmem>>, %arg4: memref<1x128xf32, #tpu.memory_space<vmem>>, %arg5: memref<8x128xf32, #tpu.memory_space<vmem>>) attributes {dimension_semantics = [#tpu.dimension_semantics<parallel>, #tpu.dimension_semantics<parallel>], iteration_bounds = array<i64: 1, 2>, scalar_prefetch = 0 : i64, scratch_operands = 0 : i64, tpu.core_type = #tpu.core_type<tc>, window_params = [{transform_indices = @transform_0, window_bounds = array<i64: 8, 128>}, {transform_indices = @transform_1, window_bounds = array<i64: 1, 128>}, {transform_indices = @transform_2, window_bounds = array<i64: 1, 128>}, {transform_indices = @transform_3, window_bounds = array<i64: 8, 128>}]} {
    %c0 = arith.constant 0 : index
    %c0_0 = arith.constant 0 : index
    %0 = vector.load %arg2[%c0, %c0_0] : memref<8x128xf32, #tpu.memory_space<vmem>>, vector<8x128xf32>
    %c0_1 = arith.constant 0 : index
    %c0_2 = arith.constant 0 : index
    %1 = vector.load %arg3[%c0_1, %c0_2] : memref<1x128xf32, #tpu.memory_space<vmem>>, vector<1x128xf32>
    %2 = vector.broadcast %1 : vector<1x128xf32> to vector<8x128xf32>
    %3 = arith.mulf %0, %2 : vector<8x128xf32>
    %c0_3 = arith.constant 0 : index
    %c0_4 = arith.constant 0 : index
    %4 = vector.load %arg4[%c0_3, %c0_4] : memref<1x128xf32, #tpu.memory_space<vmem>>, vector<1x128xf32>
    %5 = vector.broadcast %4 : vector<1x128xf32> to vector<8x128xf32>
    %6 = arith.addf %3, %5 : vector<8x128xf32>
    %c0_5 = arith.constant 0 : index
    %c0_6 = arith.constant 0 : index
    %7 = vector.load %arg5[%c0_5, %c0_6] : memref<8x128xf32, #tpu.memory_space<vmem>>, vector<8x128xf32>
    tpu.vector_store %arg5[%c0_5, %c0_6], %6 {strides = array<i32>} : memref<8x128xf32, #tpu.memory_space<vmem>>, vector<8x128xf32>,
    return
  }
  func.func @transform_0(%arg0: i32, %arg1: i32) -> (i32, i32) {
    %c0_i32 = arith.constant 0 : i32
    return %arg1, %arg0 : i32, i32
  }
  func.func @transform_1(%arg0: i32, %arg1: i32) -> (i32, i32) {
    %c0_i32 = arith.constant 0 : i32
    %c0_i32_0 = arith.constant 0 : i32
    return %c0_i32, %arg0 : i32, i32
  }
  func.func @transform_2(%arg0: i32, %arg1: i32) -> (i32, i32) {
    %c0_i32 = arith.constant 0 : i32
    %c0_i32_0 = arith.constant 0 : i32
    return %c0_i32, %arg0 : i32, i32
  }
  func.func @transform_3(%arg0: i32, %arg1: i32) -> (i32, i32) {
    %c0_i32 = arith.constant 0 : i32
    return %arg1, %arg0 : i32, i32
  }
}

</mosaic_0001>

<llo_original>
// kernel: tpu_custom_call.1
$region0: #{tpu_custom_call.1}
  #allocation0 [shape = 'u32[]', space=smem, size = 0x4, offset = 0x4, fixed_abs, tag = 'smem constant byte address 0x4 - core index']
  #allocation1 [shape = 'u32[144,128]{1,0:T(1,128)}', space=vmem, size = 0x12000, scoped, tag = 'internal scratch']
  %s0 = inlined_call_operand.hbm [shape: f32[16,128], index: 0, kind: input, shape index: {}]
  %s1 = inlined_call_operand.vmem [shape: f32[1,128], index: 1, kind: input, shape index: {}]
  %s2 = inlined_call_operand.vmem [shape: f32[1,128], index: 2, kind: input, shape index: {}]
  %s3 = inlined_call_operand.hbm [shape: f32[16,128], index: 3, kind: output, shape index: {}]
  %s4 = sld [smem:[#allocation0]]
  $region49: #{tpu_custom_call.1} parent=0
    _
  %s6 = ssub.s32 1, %s4
  %s7 = scalar_select 0, %s6, %s4
  $region1: #{tpu_custom_call.1} parent=0
    #allocation2 [shape = 'u8[8192]{0}', space=vmem, size = 0x2000, scoped, tag = 'input window, operand 0']
    #allocation3 [shape = 's32[2]{0}', space=sflag, size = 0x8, scoped, tag = 'scoped memory for tpu_custom_call.1']
    #allocation4 [shape = 's32[2]{0}', space=sflag, size = 0x8, scoped, tag = 'scoped memory for tpu_custom_call.1']
    #allocation5 [shape = 'u8[8192]{0}', space=vmem, size = 0x2000, scoped, tag = 'output window, operand 0']
    %8 = vsyncpa [#allocation3], 0
    %s9 = scalar_lea.sflag [#allocation3], 1
    %10 = vsyncpa %s9, 0
    %11 = vsyncpa [#allocation4], 0
    %s12 = scalar_lea.sflag [#allocation4], 1
    %13 = vsyncpa %s12, 0
    loop: start=0, step=1, limit=4
    $region2: #{tpu_custom_call.1} parent=1 // loop_pre_header
      _
    $region3: #{tpu_custom_call.1} parent=1 // loop_header
      %s15 = sphi 0, %s19
      %p16 = scmp.ge.s32.totalorder %s15, 4
      %s22 = sphi 0, %s34
      %s23 = sphi 0, %s30
      %s24 = sphi 0, %s22
      %s25 = sphi 0, %s23
      %s26 = sphi 0, %s24
      %s27 = sphi 0, %s25
      %s39 = sphi 0, %s41
      %s42 = sphi 0, %s39
      %s43 = sphi 0, %s42
      %s59 = sphi 0, %s43
      %s65 = sphi 0, %s67
      %s68 = sphi 0, %s65
      %s69 = sphi 0, %s68
      %s85 = sphi 0, %s69
      %s91 = sphi 0, %s93
      %s94 = sphi 0, %s91
      %s95 = sphi 0, %s94
      %s111 = sphi 0, %s95
      %s119 = sphi 0, %s121
      %s122 = sphi 0, %s119
      %s123 = sphi 0, %s122
      %s139 = sphi 0, %s123
    $region4: #{tpu_custom_call.1} parent=1 // loop_header_branch
      %18 = sbr.rel (%p16) target = $region8
    $region5: #{tpu_custom_call.1} parent=1 // loop_body
      %s20 = ssub.s32 %s15, 1
      %s21 = ssub.s32 %s15, 2
      %s28 = sadd.s32 1, %s23
      %p29 = scmp.ge.s32.totalorder %s28, 2
      %s30 = scalar_select %p29, 0, %s28
      %s31 = sadd.s32 1, %s22
      %s32 = scalar_select %p29, %s31, %s22
      %p33 = scmp.ge.s32.totalorder %s32, 1
      %s34 = scalar_select %p33, 0, %s32
      %s35 = ssub.s32 %s23, %s30
      %s36 = ssub.s32 %s22, %s34
      %s37 = sor.u32 %s35, %s36
      %p38 = scmp.eq.s32.totalorder %s37, 0
      %s40 = sadd.s32 %s39, 1
      %s41 = scalar_select %p38, %s39, %s40
      %p44 = pneg %p38
      %p45 = scmp.eq.s32.totalorder %s15, 1
      %p46 = por %p44, %p45
      %p47 = scmp.ne.s32.totalorder %s39, %s42
      %p48 = scmp.eq.s32.totalorder %s15, 0
      %p49 = por %p47, %p48
      %p50 = scmp.ne.s32.totalorder %s39, %s42
      %p51 = scmp.eq.s32.totalorder %s20, 1
      %p52 = por %p50, %p51
      %p53 = scmp.ne.s32.totalorder %s42, %s43
      %p54 = scmp.eq.s32.totalorder %s20, 0
      %p55 = por %p53, %p54
      %p56 = scmp.ne.s32.totalorder %s42, %s43
      %p57 = scmp.eq.s32.totalorder %s21, 1
      %p58 = por %p56, %p57
      %p60 = scmp.ne.s32.totalorder %s43, %s59
      %p61 = scmp.eq.s32.totalorder %s21, 0
      %p62 = por %p60, %p61
      %s63 = ssub.s32 %s22, %s34
      %p64 = scmp.eq.s32.totalorder %s63, 0
      %s66 = sadd.s32 %s65, 1
      %s67 = scalar_select %p64, %s65, %s66
      %p70 = pneg %p64
      %p71 = scmp.eq.s32.totalorder %s15, 1
      %p72 = por %p70, %p71
      %p73 = scmp.ne.s32.totalorder %s65, %s68
      %p74 = scmp.eq.s32.totalorder %s15, 0
      %p75 = por %p73, %p74
      %p76 = scmp.ne.s32.totalorder %s65, %s68
      %p77 = scmp.eq.s32.totalorder %s20, 1
      %p78 = por %p76, %p77
      %p79 = scmp.ne.s32.totalorder %s68, %s69
      %p80 = scmp.eq.s32.totalorder %s20, 0
      %p81 = por %p79, %p80
      %p82 = scmp.ne.s32.totalorder %s68, %s69
      %p83 = scmp.eq.s32.totalorder %s21, 1
      %p84 = por %p82, %p83
      %p86 = scmp.ne.s32.totalorder %s69, %s85
      %p87 = scmp.eq.s32.totalorder %s21, 0
      %p88 = por %p86, %p87
      %s89 = ssub.s32 %s22, %s34
      %p90 = scmp.eq.s32.totalorder %s89, 0
      %s92 = sadd.s32 %s91, 1
      %s93 = scalar_select %p90, %s91, %s92
      %p96 = pneg %p90
      %p97 = scmp.eq.s32.totalorder %s15, 1
      %p98 = por %p96, %p97
      %p99 = scmp.ne.s32.totalorder %s91, %s94
      %p100 = scmp.eq.s32.totalorder %s15, 0
      %p101 = por %p99, %p100
      %p102 = scmp.ne.s32.totalorder %s91, %s94
      %p103 = scmp.eq.s32.totalorder %s20, 1
      %p104 = por %p102, %p103
      %p105 = scmp.ne.s32.totalorder %s94, %s95
      %p106 = scmp.eq.s32.totalorder %s20, 0
      %p107 = por %p105, %p106
      %p108 = scmp.ne.s32.totalorder %s94, %s95
      %p109 = scmp.eq.s32.totalorder %s21, 1
      %p110 = por %p108, %p109
      %p112 = scmp.ne.s32.totalorder %s95, %s111
      %p113 = scmp.eq.s32.totalorder %s21, 0
      %p114 = por %p112, %p113
      %s115 = ssub.s32 %s23, %s30
      %s116 = ssub.s32 %s22, %s34
      %s117 = sor.u32 %s115, %s116
      %p118 = scmp.eq.s32.totalorder %s117, 0
      %s120 = sadd.s32 %s119, 1
      %s121 = scalar_select %p118, %s119, %s120
      %p124 = pneg %p118
      %p125 = scmp.eq.s32.totalorder %s15, 1
      %p126 = por %p124, %p125
      %p127 = scmp.ne.s32.totalorder %s119, %s122
      %p128 = scmp.eq.s32.totalorder %s15, 0
      %p129 = por %p127, %p128
      %p130 = scmp.ne.s32.totalorder %s119, %s122
      %p131 = scmp.eq.s32.totalorder %s20, 1
      %p132 = por %p130, %p131
      %p133 = scmp.ne.s32.totalorder %s122, %s123
      %p134 = scmp.eq.s32.totalorder %s20, 0
      %p135 = por %p133, %p134
      %p136 = scmp.ne.s32.totalorder %s122, %s123
      %p137 = scmp.eq.s32.totalorder %s21, 1
      %p138 = por %p136, %p137
      %p140 = scmp.ne.s32.totalorder %s123, %s139
      %p141 = scmp.eq.s32.totalorder %s21, 0
      %p142 = por %p140, %p141
      %p143 = scmp.le.s32.totalorder 1, %s15
      %p144 = scmp.lt.s32.totalorder %s15, 3
      %p145 = pnand %p143, %p144
      %p146 = pneg %p145
      // Predicated region
      $region9: #{tpu_custom_call.1} parent=5 // pred_check
        _
      $region10: #{tpu_custom_call.1} parent=5 // pred_check_branch
        %148 = sbr.rel (%p145) target = $region12
      $region11: #{tpu_custom_call.1} parent=5 // pred_region
        %s149 = ssub.s32 %s15, 1
        // Predicated region
        $region13: #{tpu_custom_call.1} parent=11 // pred_check
          %p150 = pneg %p81
        $region14: #{tpu_custom_call.1} parent=11 // pred_check_branch
          %152 = sbr.rel (%p150) target = $region16
        $region15: #{tpu_custom_call.1} parent=11 // pred_region
          %p153 = scmp.lt.s32.totalorder %s24, 0
          %s154 = scalar_select %p153, %s24, 0
          %s155 = scalar_lea.vmem %s1, %s154
        $region16: #{tpu_custom_call.1} parent=11 // pred_fallthru
          _
        // Predicated region
        $region17: #{tpu_custom_call.1} parent=11 // pred_check
          %p156 = pneg %p107
        $region18: #{tpu_custom_call.1} parent=11 // pred_check_branch
          %158 = sbr.rel (%p156) target = $region20
        $region19: #{tpu_custom_call.1} parent=11 // pred_region
          %p159 = scmp.lt.s32.totalorder %s24, 0
          %s160 = scalar_select %p159, %s24, 0
          %s161 = scalar_lea.vmem %s2, %s160
        $region20: #{tpu_custom_call.1} parent=11 // pred_fallthru
          _
      $region12: #{tpu_custom_call.1} parent=5 // pred_fallthru
        _
      %p162 = scmp.lt.s32.totalorder %s15, 2
      // Predicated region
      $region21: #{tpu_custom_call.1} parent=5 // pred_check
        %p163 = pneg %p162
      $region22: #{tpu_custom_call.1} parent=5 // pred_check_branch
        %165 = sbr.rel (%p163) target = $region24
      $region23: #{tpu_custom_call.1} parent=5 // pred_region
        // Predicated region
        $region25: #{tpu_custom_call.1} parent=23 // pred_check
          %p166 = pneg %p49
        $region26: #{tpu_custom_call.1} parent=23 // pred_check_branch
          %168 = sbr.rel (%p166) target = $region28
        $region27: #{tpu_custom_call.1} parent=23 // pred_region
          %s169 = sand.u32 %s39, 1
          %s170 = scalar_lea.sflag [#allocation3], %s169
          %s171 = sand.u32 %s39, 1
          %s172 = smul.addr %s171, 8
          %s173 = scalar_lea.vmem [#allocation2], %s172
          %s175 = ssub.s32 128, 128
          %176 = vsyncadd %s170, %s175
          %s177 = sadd.s32 %s22, %s23
          %s178 = smul.addr %s177, 128
          %s179 = scalar_lea.hbm %s0, %s178
          %s181 = sshll.u32 %s173, 4
          %s182 = int_to_ptr.vmem [resolvable:$true] %s181
          %184 = dma.hbm_to_vmem [thread:$0]  %s179, 128, %s182, %s170
        $region28: #{tpu_custom_call.1} parent=23 // pred_fallthru
          _
      $region24: #{tpu_custom_call.1} parent=5 // pred_fallthru
        _
      %p185 = scmp.le.s32.totalorder 1, %s15
      %p186 = scmp.lt.s32.totalorder %s15, 3
      %p187 = pnand %p185, %p186
      %p188 = pneg %p187
      // Predicated region
      $region29: #{tpu_custom_call.1} parent=5 // pred_check
        _
      $region30: #{tpu_custom_call.1} parent=5 // pred_check_branch
        %190 = sbr.rel (%p187) target = $region32
      $region31: #{tpu_custom_call.1} parent=5 // pred_region
        %s191 = ssub.s32 %s15, 1
        %s192 = sand.u32 %s42, 1
        %s193 = scalar_lea.sflag [#allocation3], %s192
        %s194 = sand.u32 %s42, 1
        %s195 = smul.addr %s194, 8
        %s196 = scalar_lea.vmem [#allocation2], %s195
        // Predicated region
        $region33: #{tpu_custom_call.1} parent=31 // pred_check
          %p197 = pneg %p55
        $region34: #{tpu_custom_call.1} parent=31 // pred_check_branch
          %199 = sbr.rel (%p197) target = $region36
        $region35: #{tpu_custom_call.1} parent=31 // pred_region
          %200 = dma.done %s193, 128
        $region36: #{tpu_custom_call.1} parent=31 // pred_fallthru
          _
        %s201 = sand.u32 %s42, 1
        %s202 = scalar_lea.sflag [#allocation3], %s201
        %s203 = sand.u32 %s42, 1
        %s204 = smul.addr %s203, 8
        %s205 = scalar_lea.vmem [#allocation2], %s204
        %p206 = pneg %p55
        %p207 = pneg %p52
        %p208 = scmp.lt.s32.totalorder %s24, 0
        %s209 = scalar_select %p208, %s24, 0
        %s210 = scalar_lea.vmem %s1, %s209
        %p211 = pneg %p81
        %p212 = pneg %p78
        %p213 = scmp.lt.s32.totalorder %s24, 0
        %s214 = scalar_select %p213, %s24, 0
        %s215 = scalar_lea.vmem %s2, %s214
        %p216 = pneg %p107
        %p217 = pneg %p104
        %p218 = pneg %p135
        %p219 = pneg %p132
        %s220 = sand.u32 %s122, 1
        %s221 = scalar_lea.sflag [#allocation4], %s220
        %s222 = sand.u32 %s122, 1
        %s223 = smul.addr %s222, 8
        %s224 = scalar_lea.vmem [#allocation5], %s223
        %p225 = scmp.lt.s32.totalorder %s24, 0
        %s226 = scalar_select %p225, %s24, 0
        %s227 = scalar_lea.vmem %s1, %s226
        %p228 = scmp.lt.s32.totalorder %s24, 0
        %s229 = scalar_select %p228, %s24, 0
        %s230 = scalar_lea.vmem %s2, %s229
        %v231 = vld [vmem:[%s196] sm:$0xff]
        %v232 = vld [vmem:[%s227] sm:$0x1]
        %v234 = vlaneseq
        %v235 = vshrl.u32 %v234, 7
        %v236 = vsub.s32 0, %v235
        %v237 = vrot.slane %v232, %v236
        %v239 = vmul.f32 %v231, %v237
        %v240 = vld [vmem:[%s230] sm:$0x1]
        %v242 = vlaneseq
        %v243 = vshrl.u32 %v242, 7
        %v244 = vsub.s32 0, %v243
        %v245 = vrot.slane %v240, %v244
        %v247 = vadd.f32 %v239, %v245
        %248 = vst [vmem:[%s224] sm:$0xff] %v247
        %s249 = sand.u32 %s122, 1
        %s250 = scalar_lea.sflag [#allocation4], %s249
        %s251 = sand.u32 %s122, 1
        %s252 = smul.addr %s251, 8
        %s253 = scalar_lea.vmem [#allocation5], %s252
        // Predicated region
        $region37: #{tpu_custom_call.1} parent=31 // pred_check
          %p254 = pneg %p132
        $region38: #{tpu_custom_call.1} parent=31 // pred_check_branch
          %256 = sbr.rel (%p254) target = $region40
        $region39: #{tpu_custom_call.1} parent=31 // pred_region
          %s258 = ssub.s32 128, 128
          %259 = vsyncadd %s250, %s258
          %s260 = sadd.s32 %s24, %s25
          %s261 = smul.addr %s260, 128
          %s262 = scalar_lea.hbm %s3, %s261
          %s264 = sshll.u32 %s253, 4
          %s265 = int_to_ptr.vmem [resolvable:$true] %s264
          %267 = dma.vmem_to_hbm [thread:$0]  %s265, 128, %s262, %s250
        $region40: #{tpu_custom_call.1} parent=31 // pred_fallthru
          _
      $region32: #{tpu_custom_call.1} parent=5 // pred_fallthru
        _
      %p268 = scmp.le.s32.totalorder 2, %s15
      // Predicated region
      $region41: #{tpu_custom_call.1} parent=5 // pred_check
        %p269 = pneg %p268
      $region42: #{tpu_custom_call.1} parent=5 // pred_check_branch
        %271 = sbr.rel (%p269) target = $region44
      $region43: #{tpu_custom_call.1} parent=5 // pred_region
        %s272 = ssub.s32 %s15, 2
        // Predicated region
        $region45: #{tpu_custom_call.1} parent=43 // pred_check
          %p273 = pneg %p138
        $region46: #{tpu_custom_call.1} parent=43 // pred_check_branch
          %275 = sbr.rel (%p273) target = $region48
        $region47: #{tpu_custom_call.1} parent=43 // pred_region
          %s276 = sand.u32 %s123, 1
          %s277 = scalar_lea.sflag [#allocation4], %s276
          %s278 = sand.u32 %s123, 1
          %s279 = smul.addr %s278, 8
          %s280 = scalar_lea.vmem [#allocation5], %s279
          %281 = dma.done %s277, 128
        $region48: #{tpu_custom_call.1} parent=43 // pred_fallthru
          _
      $region44: #{tpu_custom_call.1} parent=5 // pred_fallthru
        _
    $region6: #{tpu_custom_call.1} parent=1 // loop_footer
      %s19 = sadd.s32 1, %s15
    $region7: #{tpu_custom_call.1} parent=1 // loop_footer_branch
      %14 = sbr.rel target = $region3
    $region8: #{tpu_custom_call.1} parent=1 // loop_exit
      _
    %282 = vsyncpa [#allocation3], 1
    %s283 = scalar_lea.sflag [#allocation3], 1
    %284 = vsyncpa %s283, 1
    %285 = vsyncpa [#allocation4], 1
    %s286 = scalar_lea.sflag [#allocation4], 1
    %287 = vsyncpa %s286, 1

</llo_original>
